<compile_context>
chip_gen: v7x
topology: tpu7x:2x2x1
jax: 0.10.0
libtpu: 0.0.40
codegen_flags: <defaults>
</compile_context>

<pallas_src>
import jax
import jax.numpy as jnp
from jax import lax
from jax.experimental import pallas as pl
from jax.experimental.pallas import tpu as pltpu


def preconv_kernel(x_ref, w_ref, b_ref, o_ref, halo_ref):
    """One (row_tile, lane_tile) block of the causal depthwise conv.

    out[r, t] = w[r,0]*x[r,t-2] + w[r,1]*x[r,t-1] + w[r,2]*x[r,t] + b[r]

    The 2-sample causal boundary is handled with XLU rolls + a lane-iota mask;
    the last two lanes of each tile are carried to the next lane tile in
    `halo_ref` (VMEM scratch).  The first lane tile of every row tile uses a
    zero halo (== the causal left zero-pad of the PyTorch module).
    """
    lane_step = pl.program_id(1)

    # Reset the halo at the start of every row-tile's lane sweep (causal zero pad).
    @pl.when(lane_step == 0)
    def _():
        halo_ref[...] = jnp.zeros_like(halo_ref)

    x = x_ref[...].astype(jnp.float32)            # (R, TL)
    w = w_ref[...].astype(jnp.float32)            # (R, 3)  per-row taps
    b = b_ref[...].astype(jnp.float32)            # (R, 1)  per-row bias
    halo = halo_ref[...]                          # (R, 2)  prev tile's last 2 lanes

    lane = lax.broadcasted_iota(jnp.int32, x.shape, 1)
    not_first = lane >= 1
    # x shifted right by 1 / 2 lanes (XLU roll is ~free under the HBM bound);
    # boundary lanes are patched from the carried halo.
    x_m1 = jnp.where(not_first, pltpu.roll(x, shift=1, axis=1), halo[:, 1:2])
    x_m2 = jnp.where(not_first, pltpu.roll(x_m1, shift=1, axis=1), halo[:, 0:1])

    y = w[:, 0:1] * x_m2 + w[:, 1:2] * x_m1 + w[:, 2:3] * x + b
    o_ref[...] = y.astype(o_ref.dtype)

    # Carry this tile's last two lanes (already f32) into the next lane tile.
    tl = x.shape[1]
    halo_ref[...] = x[:, tl - 2:tl]


def _pick_tile(extent, preferred, align):
    """Largest legal tile <= preferred: full extent, or a multiple of `align`."""
    if extent <= preferred:
        return extent
    t = max(align, (preferred // align) * align)
    return min(t, extent)


def preconv(x, weight, bias, *, row_tile=256, lane_tile=1024,
            vmem_limit_bytes=32 * 1024 * 1024):
    """Causal depthwise conv1d (k=3).

    x:      (N, C, L)  f32 or bf16
    weight: (C, 3)     taps (PyTorch Conv1d weight squeezed), kept f32
    bias:   (C,)       kept f32
    returns (N, C, L) in x.dtype
    """
    N, C, L = x.shape
    rows = N * C
    x2 = x.reshape(rows, L)                                   # free collapse; L on lanes

    # Per-row taps/bias (tiny vs. x traffic); row r = n*C + c -> channel c.
    w_rows = jnp.tile(weight.astype(jnp.float32), (N, 1))              # (rows, 3)
    b_rows = jnp.tile(bias.astype(jnp.float32).reshape(C, 1), (N, 1))  # (rows, 1)

    # Sublane alignment: 8 for 4-byte dtypes, 16 for 2-byte (bf16), 32 for 1-byte.
    row_align = 8 * (4 // x.dtype.itemsize)
    rtile = _pick_tile(rows, row_tile, row_align)
    ltile = _pick_tile(L, lane_tile, 128)

    grid = (pl.cdiv(rows, rtile), pl.cdiv(L, ltile))

    out2 = pl.pallas_call(
        preconv_kernel,
        out_shape=jax.ShapeDtypeStruct((rows, L), x.dtype),
        grid_spec=pltpu.PrefetchScalarGridSpec(
            num_scalar_prefetch=0,
            grid=grid,
            in_specs=[
                # x: lane-dense (row_tile, lane_tile) streaming tile.
                # (Optionally pipeline_mode=pl.Buffered(3) to deepen input buffering.)
                pl.BlockSpec((rtile, ltile), lambda r, l: (r, l)),
                pl.BlockSpec((rtile, 3), lambda r, l: (r, 0)),
                pl.BlockSpec((rtile, 1), lambda r, l: (r, 0)),
            ],
            out_specs=pl.BlockSpec((rtile, ltile), lambda r, l: (r, l)),
            scratch_shapes=[pltpu.VMEM((rtile, 2), jnp.float32)],   # causal halo carry
        ),
        compiler_params=pltpu.CompilerParams(
            # rows shard across cores; lanes are the sequential causal sweep.
            dimension_semantics=("parallel", "arbitrary"),
            vmem_limit_bytes=vmem_limit_bytes,
        ),
    )(x2, w_rows, b_rows)

    return out2.reshape(N, C, L)


def _ref_preconv(x, weight, bias):
    """Pure-XLA reference with exact PyTorch CausalPreConv semantics (f32)."""
    C = x.shape[1]
    y = lax.conv_general_dilated(
        x.astype(jnp.float32),
        weight.astype(jnp.float32).reshape(C, 1, 3),
        window_strides=(1,),
        padding=[(2, 0)],               # causal left pad of k-1 = 2
        feature_group_count=C,
        dimension_numbers=("NCH", "OIH", "NCH"),
    )
    return y + bias.astype(jnp.float32)[None, :, None]


if __name__ == "__main__":
    key = jax.random.PRNGKey(0)

    # (1) tiny module-like shapes, single block
    # (2) shapes exercising row tiles, lane tiles and the in-kernel halo carry
    # (3) bf16 activations (half the HBM bytes), f32 taps
    configs = [
        dict(N=2, C=4, L=16, dtype=jnp.float32, row_tile=256, lane_tile=1024,
             atol=1e-5, rtol=1e-5),
        dict(N=2, C=16, L=384, dtype=jnp.float32, row_tile=16, lane_tile=128,
             atol=1e-5, rtol=1e-5),
        dict(N=2, C=16, L=256, dtype=jnp.bfloat16, row_tile=16, lane_tile=128,
             atol=5e-2, rtol=5e-2),
    ]

    for cfg in configs:
        key, kx, kw, kb = jax.random.split(key, 4)
        N, C, L = cfg["N"], cfg["C"], cfg["L"]

        # PyTorch Conv1d default init: uniform(+-1/sqrt(fan_in)), fan_in = 3.
        bound = 1.0 / jnp.sqrt(3.0)
        weight = jax.random.uniform(kw, (C, 3), jnp.float32, -bound, bound)
        bias = jax.random.uniform(kb, (C,), jnp.float32, -bound, bound)
        x = jax.random.normal(kx, (N, C, L), jnp.float32).astype(cfg["dtype"])

        y = preconv(x, weight, bias,
                    row_tile=cfg["row_tile"], lane_tile=cfg["lane_tile"])
        y = jax.block_until_ready(y)

        y_ref = _ref_preconv(x, weight, bias)

        assert y.shape == (N, C, L)
        assert y.dtype == cfg["dtype"]
        assert jnp.allclose(y.astype(jnp.float32), y_ref,
                            atol=cfg["atol"], rtol=cfg["rtol"])

    print("KERNEL_OK")
</pallas_src>

<mosaic_0001>
module attributes {stable_mosaic.version = 11 : i64} {
  func.func @preconv_kernel(%arg0: i32, %arg1: i32, %arg2: memref<8x16xf32, #tpu.memory_space<vmem>>, %arg3: memref<8x3xf32, #tpu.memory_space<vmem>>, %arg4: memref<8x1xf32, #tpu.memory_space<vmem>>, %arg5: memref<8x16xf32, #tpu.memory_space<vmem>>, %arg6: memref<8x2xf32, #tpu.memory_space<vmem>>) attributes {dimension_semantics = [#tpu.dimension_semantics<parallel>, #tpu.dimension_semantics<arbitrary>], iteration_bounds = array<i64: 1, 1>, scalar_prefetch = 0 : i64, scratch_operands = 1 : i64, tpu.core_type = #tpu.core_type<tc>, window_params = [{transform_indices = @transform_0, window_bounds = array<i64: 8, 16>}, {transform_indices = @transform_1, window_bounds = array<i64: 8, 3>}, {transform_indices = @transform_2, window_bounds = array<i64: 8, 1>}, {transform_indices = @transform_3, window_bounds = array<i64: 8, 16>}]} {
    %c0_i32 = arith.constant 0 : i32
    %0 = arith.cmpi eq, %arg1, %c0_i32 : i32
    %1 = arith.extui %0 : i1 to i32
    %c0_i32_0 = arith.constant 0 : i32
    %2 = arith.cmpi ne, %1, %c0_i32_0 : i32
    scf.if %2 {
      %cst = arith.constant 0.000000e+00 : f32
      %36 = vector.broadcast %cst : f32 to vector<8x2xf32>
      %c0_14 = arith.constant 0 : index
      %c0_15 = arith.constant 0 : index
      %37 = vector.load %arg6[%c0_14, %c0_15] : memref<8x2xf32, #tpu.memory_space<vmem>>, vector<8x2xf32>
      tpu.vector_store %arg6[%c0_14, %c0_15], %36 {strides = array<i32>} : memref<8x2xf32, #tpu.memory_space<vmem>>, vector<8x2xf32>,
    } else {
    }
    %c0 = arith.constant 0 : index
    %c0_1 = arith.constant 0 : index
    %3 = vector.load %arg2[%c0, %c0_1] : memref<8x16xf32, #tpu.memory_space<vmem>>, vector<8x16xf32>
    %c0_2 = arith.constant 0 : index
    %c0_3 = arith.constant 0 : index
    %4 = vector.load %arg3[%c0_2, %c0_3] : memref<8x3xf32, #tpu.memory_space<vmem>>, vector<8x3xf32>
    %c0_4 = arith.constant 0 : index
    %c0_5 = arith.constant 0 : index
    %5 = vector.load %arg4[%c0_4, %c0_5] : memref<8x1xf32, #tpu.memory_space<vmem>>, vector<8x1xf32>
    %c0_6 = arith.constant 0 : index
    %c0_7 = arith.constant 0 : index
    %6 = vector.load %arg6[%c0_6, %c0_7] : memref<8x2xf32, #tpu.memory_space<vmem>>, vector<8x2xf32>
    %7 = tpu.iota {dimensions = array<i32: 1>} : vector<8x16xi32>
    %c1_i32 = arith.constant 1 : i32
    %8 = vector.broadcast %c1_i32 : i32 to vector<8x16xi32>
    %9 = arith.cmpi sge, %7, %8 : vector<8x16xi32>
    %c1_i32_8 = arith.constant 1 : i32
    %10 = tpu.dynamic_rotate %3 by %c1_i32_8 dim 1 : vector<8x16xf32>, i32 -> vector<8x16xf32>
    %11 = vector.extract_strided_slice %6 {offsets = [0, 1], sizes = [8, 1], strides = [1, 1]} : vector<8x2xf32> to vector<8x1xf32>
    %12 = vector.shape_cast %11 : vector<8x1xf32> to vector<8x1xf32>
    %13 = vector.broadcast %12 : vector<8x1xf32> to vector<8x16xf32>
    %14 = arith.select %9, %10, %13 : vector<8x16xi1>, vector<8x16xf32>
    %c1_i32_9 = arith.constant 1 : i32
    %15 = tpu.dynamic_rotate %14 by %c1_i32_9 dim 1 : vector<8x16xf32>, i32 -> vector<8x16xf32>
    %16 = vector.extract_strided_slice %6 {offsets = [0, 0], sizes = [8, 1], strides = [1, 1]} : vector<8x2xf32> to vector<8x1xf32>
    %17 = vector.shape_cast %16 : vector<8x1xf32> to vector<8x1xf32>
    %18 = vector.broadcast %17 : vector<8x1xf32> to vector<8x16xf32>
    %19 = arith.select %9, %15, %18 : vector<8x16xi1>, vector<8x16xf32>
    %20 = vector.extract_strided_slice %4 {offsets = [0, 0], sizes = [8, 1], strides = [1, 1]} : vector<8x3xf32> to vector<8x1xf32>
    %21 = vector.broadcast %20 : vector<8x1xf32> to vector<8x16xf32>
    %22 = arith.mulf %21, %19 : vector<8x16xf32>
    %23 = vector.extract_strided_slice %4 {offsets = [0, 1], sizes = [8, 1], strides = [1, 1]} : vector<8x3xf32> to vector<8x1xf32>
    %24 = vector.broadcast %23 : vector<8x1xf32> to vector<8x16xf32>
    %25 = arith.mulf %24, %14 : vector<8x16xf32>
    %26 = arith.addf %22, %25 : vector<8x16xf32>
    %27 = vector.extract_strided_slice %4 {offsets = [0, 2], sizes = [8, 1], strides = [1, 1]} : vector<8x3xf32> to vector<8x1xf32>
    %28 = vector.broadcast %27 : vector<8x1xf32> to vector<8x16xf32>
    %29 = arith.mulf %28, %3 : vector<8x16xf32>
    %30 = arith.addf %26, %29 : vector<8x16xf32>
    %31 = vector.broadcast %5 : vector<8x1xf32> to vector<8x16xf32>
    %32 = arith.addf %30, %31 : vector<8x16xf32>
    %c0_10 = arith.constant 0 : index
    %c0_11 = arith.constant 0 : index
    %33 = vector.load %arg5[%c0_10, %c0_11] : memref<8x16xf32, #tpu.memory_space<vmem>>, vector<8x16xf32>
    tpu.vector_store %arg5[%c0_10, %c0_11], %32 {strides = array<i32>} : memref<8x16xf32, #tpu.memory_space<vmem>>, vector<8x16xf32>,
    %34 = vector.extract_strided_slice %3 {offsets = [0, 14], sizes = [8, 2], strides = [1, 1]} : vector<8x16xf32> to vector<8x2xf32>
    %c0_12 = arith.constant 0 : index
    %c0_13 = arith.constant 0 : index
    %35 = vector.load %arg6[%c0_12, %c0_13] : memref<8x2xf32, #tpu.memory_space<vmem>>, vector<8x2xf32>
    tpu.vector_store %arg6[%c0_12, %c0_13], %34 {strides = array<i32>} : memref<8x2xf32, #tpu.memory_space<vmem>>, vector<8x2xf32>,
    return
  }
  func.func @transform_0(%arg0: i32, %arg1: i32) -> (i32, i32) {
    %c0_i32 = arith.constant 0 : i32
    return %arg0, %arg1 : i32, i32
  }
  func.func @transform_1(%arg0: i32, %arg1: i32) -> (i32, i32) {
    %c0_i32 = arith.constant 0 : i32
    %c0_i32_0 = arith.constant 0 : i32
    return %arg0, %c0_i32 : i32, i32
  }
  func.func @transform_2(%arg0: i32, %arg1: i32) -> (i32, i32) {
    %c0_i32 = arith.constant 0 : i32
    %c0_i32_0 = arith.constant 0 : i32
    return %arg0, %c0_i32 : i32, i32
  }
  func.func @transform_3(%arg0: i32, %arg1: i32) -> (i32, i32) {
    %c0_i32 = arith.constant 0 : i32
    return %arg0, %arg1 : i32, i32
  }
}

</mosaic_0001>

<llo_original>
// kernel: tpu_custom_call.1
$region0: #{tpu_custom_call.1}
  #allocation0 [shape = 'u32[]', space=smem, size = 0x4, offset = 0x4, fixed_abs, tag = 'smem constant byte address 0x4 - core index']
  #allocation1 [shape = 'u32[144,128]{1,0:T(1,128)}', space=vmem, size = 0x12000, scoped, tag = 'internal scratch']
  #allocation2 [shape = 'f32[8,2]{1,0:T(8,128)}', space=vmem, size = 0x1000, scoped, tag = 'scratch operand']
  %s0 = inlined_call_operand.vmem [shape: f32[8,16], index: 0, kind: input, shape index: {}]
  %s1 = inlined_call_operand.vmem [shape: f32[8,3], index: 1, kind: input, shape index: {}]
  %s2 = inlined_call_operand.vmem [shape: f32[8,1], index: 2, kind: input, shape index: {}]
  %s3 = inlined_call_operand.hbm [shape: f32[8,16], index: 3, kind: output, shape index: {}]
  %s4 = sld [smem:[#allocation0]]
  $region26: #{tpu_custom_call.1} parent=0
    _
  %s6 = ssub.s32 1, %s4
  %s7 = scalar_select 0, %s6, %s4
  $region1: #{tpu_custom_call.1} parent=0
    #allocation3 [shape = 'u8[4096]{0}', space=vmem, size = 0x1000, scoped, tag = 'output window, operand 0, single buffered']
    #allocation4 [shape = 's32[1]{0}', space=sflag, size = 0x4, scoped, tag = 'scoped memory for tpu_custom_call.1']
    %8 = vsyncpa [#allocation4], 0
    // Predicated region
    $region2: #{tpu_custom_call.1} parent=1 // pred_check
      _
    $region3: #{tpu_custom_call.1} parent=1 // pred_check_branch
      %10 = sbr.rel (0) target = $region5
    $region4: #{tpu_custom_call.1} parent=1 // pred_region
      _
    $region5: #{tpu_custom_call.1} parent=1 // pred_fallthru
      _
    // Predicated region
    $region6: #{tpu_custom_call.1} parent=1 // pred_check
      _
    $region7: #{tpu_custom_call.1} parent=1 // pred_check_branch
      %12 = sbr.rel (0) target = $region9
    $region8: #{tpu_custom_call.1} parent=1 // pred_region
      _
    $region9: #{tpu_custom_call.1} parent=1 // pred_fallthru
      _
    // Predicated region
    $region10: #{tpu_custom_call.1} parent=1 // pred_check
      _
    $region11: #{tpu_custom_call.1} parent=1 // pred_check_branch
      %14 = sbr.rel (0) target = $region13
    $region12: #{tpu_custom_call.1} parent=1 // pred_region
      _
    $region13: #{tpu_custom_call.1} parent=1 // pred_fallthru
      _
    %p15 = scmp.eq.s32.totalorder 0, 0
    // Predicated region
    $region14: #{tpu_custom_call.1} parent=1 // pred_check
      %p16 = pneg %p15
    $region15: #{tpu_custom_call.1} parent=1 // pred_check_branch
      %18 = sbr.rel (%p16) target = $region17
    $region16: #{tpu_custom_call.1} parent=1 // pred_region
      %vm19 = vcmask 15360
      %20 = vst.msk [vmem:[#allocation2] sm:$0xff] %vm19, 0.0
    $region17: #{tpu_custom_call.1} parent=1 // pred_fallthru
      _
    %v21 = vld [vmem:[%s0] sm:$0xff]
    %v22 = vld [vmem:[%s1] sm:$0xff]
    %v23 = vld [vmem:[%s2] sm:$0xff]
    %v24 = vld [vmem:[#allocation2] sm:$0xff]
    %v25 = vlaneseq
    %v26 = vand.u32 %v25, 127
    %vm27 = vcmp.ge.s32.totalorder %v26, 1
    %vm28 = vcmask 1047680
    %29 = vrot.lane.b32.xlu0 %v21, 16
    %v30 = vpop.permute.xlu0 %29
    %v31 = vsel %vm28, %v30, %v21
    %32 = vrot.lane.b32.xlu0 %v31, 16
    %v33 = vpop.permute.xlu0 %32
    %v34 = vsel %vm28, %v33, %v21
    %36 = vset.pattern.permute.xlu0 1
    %37 = vperm.xlu0 %36, %v24
    %v38 = vpop.permute.xlu0 %37
    %41 = vrot.lane.b32.xlu0 %v34, 113
    %v42 = vpop.permute.xlu0 %41
    %v44 = vsel %vm27, %v42, %v38
    %45 = vrot.lane.b32.xlu0 %v44, 16
    %v46 = vpop.permute.xlu0 %45
    %v47 = vsel %vm28, %v46, %v44
    %48 = vrot.lane.b32.xlu0 %v47, 16
    %v49 = vpop.permute.xlu0 %48
    %v50 = vsel %vm28, %v49, %v44
    %51 = vset.pattern.permute.xlu0 0
    %52 = vperm.xlu0 %51, %v24
    %v53 = vpop.permute.xlu0 %52
    %56 = vrot.lane.b32.xlu0 %v50, 113
    %v57 = vpop.permute.xlu0 %56
    %v59 = vsel %vm27, %v57, %v53
    %61 = vset.pattern.permute.xlu0 0
    %62 = vperm.xlu0 %61, %v22
    %v63 = vpop.permute.xlu0 %62
    %v65 = vmul.f32 %v63, %v59
    %66 = vset.pattern.permute.xlu0 1
    %67 = vperm.xlu0 %66, %v22
    %v68 = vpop.permute.xlu0 %67
    %v70 = vmul.f32 %v68, %v44
    %v71 = vadd.f32 %v65, %v70
    %72 = vset.pattern.permute.xlu0 2
    %73 = vperm.xlu0 %72, %v22
    %v74 = vpop.permute.xlu0 %73
    %v76 = vmul.f32 %v74, %v21
    %v77 = vadd.f32 %v71, %v76
    %79 = vset.pattern.permute.xlu0 0
    %80 = vperm.xlu0 %79, %v23
    %v81 = vpop.permute.xlu0 %80
    %v83 = vadd.f32 %v77, %v81
    %vm84 = vcmask 130048
    %85 = vst.msk [vmem:[#allocation3] sm:$0xff] %vm84, %v83
    %87 = vrot.lane.b32.xlu0 %v21, 114
    %v88 = vpop.permute.xlu0 %87
    %vm90 = vcmask 15360
    %91 = vst.msk [vmem:[#allocation2] sm:$0xff] %vm90, %v88
    // Predicated region
    $region18: #{tpu_custom_call.1} parent=1 // pred_check
      _
    $region19: #{tpu_custom_call.1} parent=1 // pred_check_branch
      %93 = sbr.rel (0) target = $region21
    $region20: #{tpu_custom_call.1} parent=1 // pred_region
      %s95 = ssub.s32 128, 128
      %96 = vsyncadd [#allocation4], %s95
      %s98 = sshll.u32 [#allocation3], 4
      %s99 = int_to_ptr.vmem [resolvable:$true] %s98
      %101 = dma.vmem_to_hbm [thread:$0]  %s99, 128, %s3, [#allocation4]
    $region21: #{tpu_custom_call.1} parent=1 // pred_fallthru
      _
    // Predicated region
    $region22: #{tpu_custom_call.1} parent=1 // pred_check
      _
    $region23: #{tpu_custom_call.1} parent=1 // pred_check_branch
      %103 = sbr.rel (0) target = $region25
    $region24: #{tpu_custom_call.1} parent=1 // pred_region
      %104 = dma.done [#allocation4], 128
    $region25: #{tpu_custom_call.1} parent=1 // pred_fallthru
      _
    %105 = vsyncpa [#allocation4], 1

</llo_original>
